<compile_context>
chip_gen: v5e
topology: v5e:2x2
jax: 0.10.0
libtpu: 0.0.40
codegen_flags: <defaults>
</compile_context>

<pallas_src>
import jax
import jax.numpy as jnp
from jax.experimental import pallas as pl
from jax.experimental.pallas import tpu as pltpu

_LANE = 128
_SMALL_BYTES = 1 << 20  # below this, default path skips the materializing copy


def _copy_kernel(x_ref, o_ref):
    """Pure tile copy (x_ref and o_ref are identically shaped VMEM tiles)."""
    o_ref[...] = x_ref[...]


def _packed_sublanes(dtype):
    """Sublane packing multiple: 8 for 32-bit, 16 for bf16, 32 for int8/fp8."""
    itemsize = jnp.dtype(dtype).itemsize
    return 8 * max(1, 4 // itemsize)


def _vmem_budget(per_buf_override=None):
    """Generation-aware per-buffer tile budget and scoped-VMEM limit."""
    try:
        phys = int(pltpu.get_tpu_info().vmem_capacity_bytes)
    except Exception:  # query unavailable (e.g. interpret mode) -> be conservative
        phys = 64 << 20
    if phys >= (128 << 20):          # v5e / v6e: 128 MiB physical VMEM
        per_buf, vmem_limit = 8 << 20, 64 << 20
    else:                            # v7x: 64 MiB physical VMEM (or unknown)
        per_buf, vmem_limit = 6 << 20, 32 << 20
    if per_buf_override is not None:
        per_buf = per_buf_override
    return per_buf, vmem_limit


def _fallback_copy_2d(x2d, per_buf, vmem_limit):
    """Row-tiled (N, M) copy for sizes where the dense flat factorization
    does not apply (N*M not a multiple of 128)."""
    n, m = x2d.shape
    itemsize = jnp.dtype(x2d.dtype).itemsize
    sub = _packed_sublanes(x2d.dtype)
    row_bytes = max(1, m * itemsize)
    tr = per_buf // row_bytes
    if n <= sub or tr >= n:
        tr = n                                   # full batch dim -> layout-exempt
    else:
        tr = max(sub, (tr // sub) * sub)
    grid = (pl.cdiv(n, tr),)
    return pl.pallas_call(
        _copy_kernel,
        out_shape=jax.ShapeDtypeStruct((n, m), x2d.dtype),
        grid=grid,
        in_specs=[pl.BlockSpec((tr, m), lambda i: (i, 0))],
        out_specs=pl.BlockSpec((tr, m), lambda i: (i, 0)),
        compiler_params=pltpu.CompilerParams(
            dimension_semantics=("parallel",),
            vmem_limit_bytes=vmem_limit),
        cost_estimate=pl.CostEstimate(
            flops=0, transcendentals=0, bytes_accessed=2 * n * m * itemsize),
    )(x2d)


def _flatten_materialized(x2d, per_buf_bytes=None):
    """Materialize a flattened copy of x2d (shape (N, M)) with a Pallas kernel."""
    n, m = x2d.shape
    dtype = x2d.dtype
    itemsize = jnp.dtype(dtype).itemsize
    sub = _packed_sublanes(dtype)
    per_buf, vmem_limit = _vmem_budget(per_buf_bytes)

    total = n * m
    if total == 0:
        return x2d
    if total % _LANE != 0:
        return _fallback_copy_2d(x2d, per_buf, vmem_limit)

    # --- dense flat factorization: (N*M,) -> (R, C), metadata-only reshapes ---
    flat = jnp.reshape(x2d, (total,))
    C = _LANE
    for w in (32, 16, 8, 4, 2):                  # prefer a wide lane dim when R
        c = _LANE * w                            # stays a packed-sublane multiple
        if total % c == 0 and (total // c) % sub == 0:
            C = c
            break
    R = total // C
    x_rc = jnp.reshape(flat, (R, C))

    # Row-tile choice: multiple of the packed sublane count, within the VMEM
    # budget, preferring a size that divides R (no masked last tile).
    budget_rows = per_buf // (C * itemsize)
    if budget_rows >= R or R < sub:
        tr = R                                   # single full-extent block
    else:
        tr = max(sub, (budget_rows // sub) * sub)
        if R % sub == 0:
            t = tr
            for _ in range(512):                 # bounded divisor search
                if t < sub:
                    break
                if R % t == 0:
                    tr = t
                    break
                t -= sub
        tr = min(tr, R)

    grid = (pl.cdiv(R, tr),)
    out_rc = pl.pallas_call(
        _copy_kernel,
        out_shape=jax.ShapeDtypeStruct((R, C), dtype),
        grid=grid,
        in_specs=[pl.BlockSpec((tr, C), lambda i: (i, 0))],
        out_specs=pl.BlockSpec((tr, C), lambda i: (i, 0)),
        compiler_params=pltpu.CompilerParams(
            dimension_semantics=("parallel",),   # 1-D grid: both v7x TCs get blocks
            vmem_limit_bytes=vmem_limit),
        cost_estimate=pl.CostEstimate(
            flops=0, transcendentals=0, bytes_accessed=2 * total * itemsize),
    )(x_rc)
    return jnp.reshape(out_rc, (n, m))


def flatten_forward(x, materialize="auto"):
    """Flatten all trailing dims: (N, d1, d2, ...) -> (N, d1*d2*...).

    materialize:
      "auto"  -- metadata-only reshape for small tensors, Pallas copy otherwise.
      False   -- always metadata-only reshape (matches torch .view aliasing).
      True    -- always run the materializing Pallas copy.
    """
    n = x.shape[0]
    m = 1
    for d in x.shape[1:]:
        m *= d
    x2d = jnp.reshape(x, (n, m))                 # metadata-only when contiguous

    total_bytes = n * m * jnp.dtype(x.dtype).itemsize
    if materialize is False:
        return x2d
    if materialize == "auto" and total_bytes < _SMALL_BYTES:
        return x2d                               # kernel launch would dominate
    return _flatten_materialized(x2d)


if __name__ == "__main__":
    key = jax.random.PRNGKey(0)
    k1, k2, k3 = jax.random.split(key, 3)

    # Primary test: typical conv-feature-map input, force the Pallas copy path.
    x = jax.random.normal(k1, (2, 4, 16, 16), dtype=jnp.float32) * 2.0 + 0.5
    ref = jnp.reshape(x, (2, 4 * 16 * 16))
    out = flatten_forward(x, materialize=True)
    jax.block_until_ready(out)
    assert out.shape == ref.shape, f"bad shape {out.shape}"
    assert jnp.array_equal(out, ref), "flatten output mismatch (f32)"

    # Multi-block dense grid (tiny per-buffer budget forces grid > 1).
    y = jax.random.normal(k2, (8, 8, 32, 32), dtype=jnp.float32)
    ref_y = jnp.reshape(y, (8, 8 * 32 * 32))
    out_y = _flatten_materialized(jnp.reshape(y, (8, -1)), per_buf_bytes=64 << 10)
    jax.block_until_ready(out_y)
    assert jnp.array_equal(out_y, ref_y), "flatten output mismatch (tiled)"

    # bf16 (packed sublane multiple of 16) through the dense path.
    z = jax.random.normal(k3, (2, 6, 16, 16), dtype=jnp.bfloat16)
    out_z = flatten_forward(z, materialize=True)
    jax.block_until_ready(out_z)
    assert jnp.array_equal(out_z, jnp.reshape(z, (2, -1))), "mismatch (bf16)"

    # Non-128-divisible total -> 2-D fallback path.
    w = jnp.arange(2 * 3 * 5 * 7, dtype=jnp.float32).reshape(2, 3, 5, 7)
    out_w = flatten_forward(w, materialize=True)
    jax.block_until_ready(out_w)
    assert jnp.array_equal(out_w, jnp.reshape(w, (2, -1))), "mismatch (fallback)"

    # Default fast path (metadata-only, matches torch .view semantics).
    assert jnp.array_equal(flatten_forward(x), ref), "mismatch (fast path)"

    print("KERNEL_OK")
</pallas_src>

<mosaic_0001>
module attributes {stable_mosaic.version = 11 : i64} {
  func.func @_copy_kernel(%arg0: i32, %arg1: memref<8x256xf32, #tpu.memory_space<vmem>>, %arg2: memref<8x256xf32, #tpu.memory_space<vmem>>) attributes {dimension_semantics = [#tpu.dimension_semantics<parallel>], iteration_bounds = array<i64: 1>, scalar_prefetch = 0 : i64, scratch_operands = 0 : i64, tpu.core_type = #tpu.core_type<tc>, window_params = [{transform_indices = @transform_0, window_bounds = array<i64: 8, 256>}, {transform_indices = @transform_1, window_bounds = array<i64: 8, 256>}]} {
    %c0 = arith.constant 0 : index
    %c0_0 = arith.constant 0 : index
    %0 = vector.load %arg1[%c0, %c0_0] : memref<8x256xf32, #tpu.memory_space<vmem>>, vector<8x256xf32>
    %c0_1 = arith.constant 0 : index
    %c0_2 = arith.constant 0 : index
    %1 = vector.load %arg2[%c0_1, %c0_2] : memref<8x256xf32, #tpu.memory_space<vmem>>, vector<8x256xf32>
    tpu.vector_store %arg2[%c0_1, %c0_2], %0 {strides = array<i32>} : memref<8x256xf32, #tpu.memory_space<vmem>>, vector<8x256xf32>,
    return
  }
  func.func @transform_0(%arg0: i32) -> (i32, i32) {
    %c0_i32 = arith.constant 0 : i32
    %c0_i32_0 = arith.constant 0 : i32
    return %arg0, %c0_i32 : i32, i32
  }
  func.func @transform_1(%arg0: i32) -> (i32, i32) {
    %c0_i32 = arith.constant 0 : i32
    %c0_i32_0 = arith.constant 0 : i32
    return %arg0, %c0_i32 : i32, i32
  }
}

</mosaic_0001>

<llo_original>
// kernel: tpu_custom_call.1
$region0: #{tpu_custom_call.1}
  #allocation0 [shape = 'u32[]', space=smem, size = 0x4, offset = 0x4, fixed_abs, tag = 'smem constant byte address 0x4 - core index']
  #allocation1 [shape = 'u32[72,128]{1,0:T(1,128)}', space=vmem, size = 0x9000, scoped, tag = 'internal scratch']
  %s0 = inlined_call_operand.hbm [shape: f32[8,256], index: 0, kind: input, shape index: {}]
  %s1 = inlined_call_operand.hbm [shape: f32[8,256], index: 1, kind: output, shape index: {}]
  %s2 = sld [smem:[#allocation0]]
  $region18: #{tpu_custom_call.1} parent=0
    _
  %s4 = ssub.s32 1, %s2
  %s5 = scalar_select 0, %s4, %s2
  $region1: #{tpu_custom_call.1} parent=0
    #allocation2 [shape = 'u8[8192]{0}', space=vmem, size = 0x2000, scoped, tag = 'input window, operand 0, single buffered']
    #allocation3 [shape = 's32[1]{0}', space=sflag, size = 0x4, scoped, tag = 'scoped memory for tpu_custom_call.1']
    #allocation4 [shape = 's32[1]{0}', space=sflag, size = 0x4, scoped, tag = 'scoped memory for tpu_custom_call.1']
    #allocation5 [shape = 'u8[8192]{0}', space=vmem, size = 0x2000, scoped, tag = 'output window, operand 0, single buffered']
    %6 = vsyncpa [#allocation3], 0
    %7 = vsyncpa [#allocation4], 0
    // Predicated region
    $region2: #{tpu_custom_call.1} parent=1 // pred_check
      _
    $region3: #{tpu_custom_call.1} parent=1 // pred_check_branch
      %9 = sbr.rel (0) target = $region5
    $region4: #{tpu_custom_call.1} parent=1 // pred_region
      %11 = vsyncadd [#allocation3], 0
      %s13 = sshll.u32 %s0, 4
      %s14 = int_to_ptr.hbm [resolvable:$true] %s13
      %s15 = sshll.u32 [#allocation2], 4
      %s16 = int_to_ptr.vmem [resolvable:$true] %s15
      %18 = dma.hbm_to_vmem [thread:$0]  %s14, 256, %s16, [#allocation3]
    $region5: #{tpu_custom_call.1} parent=1 // pred_fallthru
      _
    // Predicated region
    $region6: #{tpu_custom_call.1} parent=1 // pred_check
      _
    $region7: #{tpu_custom_call.1} parent=1 // pred_check_branch
      %20 = sbr.rel (0) target = $region9
    $region8: #{tpu_custom_call.1} parent=1 // pred_region
      %22 = dma.done [#allocation3], 256
    $region9: #{tpu_custom_call.1} parent=1 // pred_fallthru
      _
    %v23 = vld [vmem:[#allocation2] sm:$0xff]
    %v24 = vld [vmem:[#allocation2 + $0x8] sm:$0xff]
    %25 = vst [vmem:[#allocation5] sm:$0xff] %v23
    %26 = vst [vmem:[#allocation5 + $0x8] sm:$0xff] %v24
    // Predicated region
    $region10: #{tpu_custom_call.1} parent=1 // pred_check
      _
    $region11: #{tpu_custom_call.1} parent=1 // pred_check_branch
      %28 = sbr.rel (0) target = $region13
    $region12: #{tpu_custom_call.1} parent=1 // pred_region
      %30 = vsyncadd [#allocation4], 0
      %s32 = sshll.u32 [#allocation5], 4
      %s33 = int_to_ptr.vmem [resolvable:$true] %s32
      %s34 = sshll.u32 %s1, 4
      %s35 = int_to_ptr.hbm [resolvable:$true] %s34
      %37 = dma.vmem_to_hbm [thread:$0]  %s33, 256, %s35, [#allocation4]
    $region13: #{tpu_custom_call.1} parent=1 // pred_fallthru
      _
    // Predicated region
    $region14: #{tpu_custom_call.1} parent=1 // pred_check
      _
    $region15: #{tpu_custom_call.1} parent=1 // pred_check_branch
      %39 = sbr.rel (0) target = $region17
    $region16: #{tpu_custom_call.1} parent=1 // pred_region
      %41 = dma.done [#allocation4], 256
    $region17: #{tpu_custom_call.1} parent=1 // pred_fallthru
      _
    %42 = vsyncpa [#allocation3], 1
    %43 = vsyncpa [#allocation4], 1

</llo_original>
